<compile_context>
chip_gen: v5e
topology: v5e:2x2
jax: 0.10.0
libtpu: 0.0.40
codegen_flags: <defaults>
</compile_context>

<pallas_src>
import functools

import jax
import jax.numpy as jnp
from jax.experimental import pallas as pl
from jax.experimental.pallas import tpu as pltpu

LN_EPS = 1e-12  # BERT LayerNorm eps


def _round_up(n, m):
    return ((n + m - 1) // m) * m


def _tpu_vmem_capacity_bytes():
    """Per-core VMEM capacity; conservative 64 MiB fallback if the query fails."""
    try:
        return int(pltpu.get_tpu_info().vmem_capacity_bytes)
    except Exception:  # pragma: no cover - e.g. interpret mode / older jax
        return 64 << 20


def _bert_fcn_kernel(x_ref, w1_ref, b1_ref, w2_ref, b2_ref, g_ref, beta_ref,
                     o_ref, acc_ref, *, approx_gelu):
    """One (token-tile, I-tile) grid step of the BERT FFN block.

    x_ref   : (TM, H)   f32   input hidden states (also the residual)
    w1_ref  : (H, TI)   bf16  intermediate dense weight    b1_ref: (1, TI) f32
    w2_ref  : (TI, H)   bf16  output dense weight          b2_ref: (1, H)  f32
    g_ref   : (1, H)    f32   LayerNorm gamma              beta_ref: (1, H) f32
    o_ref   : (TM, H)         output tile (written on last I-step)
    acc_ref : (TM, H)   f32   VMEM accumulator across I-steps
    """
    j = pl.program_id(1)
    nj = pl.num_programs(1)

    x = x_ref[...]                              # residual stays in f32
    x_mx = x.astype(jnp.bfloat16)               # bf16 operand for the MXU

    # BertIntermediate: Linear (bf16 x bf16 -> f32 acc) + GELU.
    inter = jnp.dot(x_mx, w1_ref[...], preferred_element_type=jnp.float32)
    inter = inter + b1_ref[...]
    # approximate=True -> tanh form (EUP); False -> exact erf (matches PyTorch).
    inter = jax.nn.gelu(inter, approximate=approx_gelu)

    # BertOutput first half: Linear partial product over this I-tile.
    partial = jnp.dot(inter.astype(jnp.bfloat16), w2_ref[...],
                      preferred_element_type=jnp.float32)

    @pl.when(j == 0)
    def _():
        acc_ref[...] = partial

    @pl.when(j > 0)
    def _():
        acc_ref[...] += partial

    # Epilogue only on the last I-step: bias + dropout(identity, eval) + residual
    # + LayerNorm, then the single lane-dense store of the output tile.
    @pl.when(j == nj - 1)
    def _():
        h = acc_ref[...] + b2_ref[...] + x.astype(jnp.float32)
        mean = jnp.mean(h, axis=-1, keepdims=True)
        centered = h - mean
        var = jnp.mean(centered * centered, axis=-1, keepdims=True)
        out = centered * jax.lax.rsqrt(var + LN_EPS)
        out = out * g_ref[...] + beta_ref[...]
        o_ref[...] = out.astype(o_ref.dtype)


def _est_vmem_bytes(tm, H, tI, x_itemsize, wbuf):
    """Rough VMEM need for one pipeline configuration."""
    weights = wbuf * (2 * H * tI * 2 + tI * 4)     # w1 + w2 tiles (bf16) + b1 tile
    vecs = 3 * H * 4                               # b2, gamma, beta (single-buffered)
    xo = 2 * 2 * tm * H * x_itemsize               # x in + out tiles, double-buffered
    acc = tm * H * 4                               # f32 accumulator scratch
    body = tm * tI * 6 + tm * H * 12               # in-body f32/bf16 intermediates
    return weights + vecs + xo + acc + body


def _select_i_tile(tm, H, I, x_itemsize, cap, i_tile):
    """Pick the intermediate-dim tile so resident weight tiles fit VMEM."""
    budget = cap - (8 << 20)                       # headroom for Mosaic internal scratch
    if i_tile is not None:
        return min(_round_up(i_tile, 128), _round_up(I, 128))
    if _est_vmem_bytes(tm, H, I, x_itemsize, wbuf=1) <= budget:
        return I                                   # full-I weights stay resident
    tI = _round_up(I, 128)
    while tI > 128 and _est_vmem_bytes(tm, H, tI, x_itemsize, wbuf=2) > budget:
        tI = _round_up(tI // 2, 128)
    return tI


def bert_fcn(x, params, *, token_tile=None, i_tile=None, approx_gelu=True):
    """x: (B, S, H) float32. Returns a 1-tuple (layer_output,), matching BertFCN.forward."""
    w1 = params["w1"].astype(jnp.bfloat16)
    w2 = params["w2"].astype(jnp.bfloat16)
    b1, b2 = params["b1"], params["b2"]
    gamma, beta = params["ln_gamma"], params["ln_beta"]

    B, S, H = x.shape
    I = w1.shape[1]
    tokens = B * S
    itemsize = x.dtype.itemsize

    cap = _tpu_vmem_capacity_bytes()

    # --- token tiling -------------------------------------------------------
    # Generation-aware default: bigger tiles on 128 MiB VMEM parts (v5e/v6e),
    # 256 on 64 MiB parts (v7x). Multiple of 16 for bf16 sublane packing.
    if token_tile is None:
        token_tile = 512 if cap >= (96 << 20) else 256
    tm = min(token_tile, _round_up(tokens, 16))
    tm = max(16, _round_up(tm, 16))
    tokens_padded = _round_up(tokens, tm)
    num_tiles = tokens_padded // tm
    # On 2-TensorCore parts (<=64 MiB VMEM) keep the parallel grid length even so
    # megacore sharding does not strand one core on the tail step.
    if cap < (96 << 20) and num_tiles > 1 and (num_tiles % 2):
        num_tiles += 1
        tokens_padded = num_tiles * tm

    # --- intermediate (I) tiling -------------------------------------------
    tI = _select_i_tile(tm, H, I, itemsize, cap, i_tile)
    nj = -(-I // tI)
    I_pad = nj * tI

    # --- operand prep / padding ---------------------------------------------
    x2d = x.reshape(tokens, H)
    if tokens_padded != tokens:
        x2d = jnp.pad(x2d, ((0, tokens_padded - tokens), (0, 0)))

    b1_2d = b1.reshape(1, I).astype(jnp.float32)
    if I_pad != I:
        # Zero-padded I columns produce gelu(0)=0 and hit zero rows of w2 -> no effect.
        w1 = jnp.pad(w1, ((0, 0), (0, I_pad - I)))
        w2 = jnp.pad(w2, ((0, I_pad - I), (0, 0)))
        b1_2d = jnp.pad(b1_2d, ((0, 0), (0, I_pad - I)))
    b2_2d = b2.reshape(1, H).astype(jnp.float32)
    g_2d = gamma.reshape(1, H).astype(jnp.float32)
    beta_2d = beta.reshape(1, H).astype(jnp.float32)

    # --- specs ---------------------------------------------------------------
    # Single-buffer operands whose block never changes across the grid; keep the
    # default double-buffering for weight tiles when they actually stream over I.
    w_mode = pl.Buffered(1) if nj == 1 else None
    const_mode = pl.Buffered(1)

    def _spec(shape, index_map, mode=None):
        if mode is None:
            return pl.BlockSpec(shape, index_map)
        return pl.BlockSpec(shape, index_map, pipeline_mode=mode)

    in_specs = [
        _spec((tm, H), lambda i, j: (i, 0)),                  # x tile (streamed)
        _spec((H, tI), lambda i, j: (0, j), w_mode),          # w1 tile (bf16)
        _spec((1, tI), lambda i, j: (0, j), w_mode),          # b1 tile
        _spec((tI, H), lambda i, j: (j, 0), w_mode),          # w2 tile (bf16)
        _spec((1, H), lambda i, j: (0, 0), const_mode),       # b2
        _spec((1, H), lambda i, j: (0, 0), const_mode),       # gamma
        _spec((1, H), lambda i, j: (0, 0), const_mode),       # beta
    ]
    out_specs = pl.BlockSpec((tm, H), lambda i, j: (i, 0))

    wbuf = 1 if nj == 1 else 2
    est = _est_vmem_bytes(tm, H, tI, itemsize, wbuf)
    vmem_limit = min(max(int(est * 1.25) + (4 << 20), 32 << 20), cap - (8 << 20))
    vmem_limit = max(vmem_limit, 16 << 20)

    flops = 2 * tokens_padded * H * I_pad * 2                 # two matmuls
    transcendentals = tokens_padded * I_pad if approx_gelu else 0
    bytes_accessed = (2 * H * I_pad * 2 + I_pad * 4           # bf16 weights + b1
                      + 2 * tokens_padded * H * itemsize      # x in, out
                      + 3 * H * 4)                            # b2, gamma, beta
    cost = pl.CostEstimate(flops=int(flops),
                           transcendentals=int(transcendentals),
                           bytes_accessed=int(bytes_accessed))

    out2d = pl.pallas_call(
        functools.partial(_bert_fcn_kernel, approx_gelu=approx_gelu),
        out_shape=jax.ShapeDtypeStruct((tokens_padded, H), x.dtype),
        grid=(num_tiles, nj),
        in_specs=in_specs,
        out_specs=out_specs,
        scratch_shapes=[pltpu.VMEM((tm, H), jnp.float32)],
        compiler_params=pltpu.CompilerParams(
            dimension_semantics=("parallel", "arbitrary"),
            vmem_limit_bytes=vmem_limit,
        ),
        cost_estimate=cost,
    )(x2d, w1, b1_2d, w2, b2_2d, g_2d, beta_2d)

    out2d = out2d[:tokens]
    return (out2d.reshape(B, S, H),)


def init_params(key, hidden, intermediate, dtype=jnp.float32):
    k1, k2, k3, k4 = jax.random.split(key, 4)
    scale = 0.02
    return {
        "w1": (scale * jax.random.normal(k1, (hidden, intermediate))).astype(dtype),
        "b1": (scale * jax.random.normal(k2, (intermediate,))).astype(dtype),
        "w2": (scale * jax.random.normal(k3, (intermediate, hidden))).astype(dtype),
        "b2": (scale * jax.random.normal(k4, (hidden,))).astype(dtype),
        "ln_gamma": jnp.ones((hidden,), dtype),
        "ln_beta": jnp.zeros((hidden,), dtype),
    }


def _reference(x, p):
    """Pure f32, exact-erf-GELU reference matching the PyTorch BertFCN forward (eval)."""
    inter = jnp.dot(x, p["w1"]) + p["b1"]
    inter = jax.nn.gelu(inter, approximate=False)
    h = jnp.dot(inter, p["w2"]) + p["b2"] + x          # dropout is identity in eval
    mean = jnp.mean(h, axis=-1, keepdims=True)
    var = jnp.mean((h - mean) ** 2, axis=-1, keepdims=True)
    return (h - mean) * jax.lax.rsqrt(var + LN_EPS) * p["ln_gamma"] + p["ln_beta"]


if __name__ == "__main__":
    # Small BERT-like config: batch=2, seq=8, hidden=128, intermediate=512 (4x hidden).
    B, S, H, I = 2, 8, 128, 512
    key = jax.random.PRNGKey(0)
    kx, kp = jax.random.split(key)

    x = jax.random.normal(kx, (B, S, H), dtype=jnp.float32)
    params = init_params(kp, H, I)
    ref = _reference(x, params)

    # 1) default path: resident single-buffered weights, nj == 1.
    (out,) = jax.block_until_ready(bert_fcn(x, params))
    assert out.shape == (B, S, H)
    err = float(jnp.max(jnp.abs(out - ref)))
    assert err < 5e-3, f"Pallas output mismatch vs f32 reference: {err}"

    # 2) I-tiled reduction path (forced small tiles) to exercise the accumulator grid axis.
    (out_tiled,) = jax.block_until_ready(bert_fcn(x, params, token_tile=16, i_tile=128))
    err_tiled = float(jnp.max(jnp.abs(out_tiled - ref)))
    assert err_tiled < 5e-3, f"I-tiled path mismatch vs f32 reference: {err_tiled}"

    # 3) ragged token count (padding path, multi-tile token grid).
    x2 = jax.random.normal(kx, (2, 12, H), dtype=jnp.float32)
    ref2 = _reference(x2, params)
    (out2,) = jax.block_until_ready(bert_fcn(x2, params, token_tile=16))
    err2 = float(jnp.max(jnp.abs(out2 - ref2)))
    assert out2.shape == (2, 12, H)
    assert err2 < 5e-3, f"padded-token path mismatch vs f32 reference: {err2}"

    print("KERNEL_OK")
</pallas_src>

<mosaic_0001>
module attributes {stable_mosaic.version = 11 : i64} {
  func.func @_bert_fcn_kernel(%arg0: i32, %arg1: i32, %arg2: memref<16x128xf32, #tpu.memory_space<vmem>>, %arg3: memref<128x512xbf16, #tpu.memory_space<vmem>>, %arg4: memref<1x512xf32, #tpu.memory_space<vmem>>, %arg5: memref<512x128xbf16, #tpu.memory_space<vmem>>, %arg6: memref<1x128xf32, #tpu.memory_space<vmem>>, %arg7: memref<1x128xf32, #tpu.memory_space<vmem>>, %arg8: memref<1x128xf32, #tpu.memory_space<vmem>>, %arg9: memref<16x128xf32, #tpu.memory_space<vmem>>, %arg10: memref<16x128xf32, #tpu.memory_space<vmem>>) attributes {dimension_semantics = [#tpu.dimension_semantics<parallel>, #tpu.dimension_semantics<arbitrary>], iteration_bounds = array<i64: 1, 1>, scalar_prefetch = 0 : i64, scratch_operands = 1 : i64, tpu.core_type = #tpu.core_type<tc>, window_params = [{transform_indices = @transform_0, window_bounds = array<i64: 16, 128>}, {pipeline_mode = #tpu.pipeline_mode<synchronous>, transform_indices = @transform_1, window_bounds = array<i64: 128, 512>}, {pipeline_mode = #tpu.pipeline_mode<synchronous>, transform_indices = @transform_2, window_bounds = array<i64: 1, 512>}, {pipeline_mode = #tpu.pipeline_mode<synchronous>, transform_indices = @transform_3, window_bounds = array<i64: 512, 128>}, {pipeline_mode = #tpu.pipeline_mode<synchronous>, transform_indices = @transform_4, window_bounds = array<i64: 1, 128>}, {pipeline_mode = #tpu.pipeline_mode<synchronous>, transform_indices = @transform_5, window_bounds = array<i64: 1, 128>}, {pipeline_mode = #tpu.pipeline_mode<synchronous>, transform_indices = @transform_6, window_bounds = array<i64: 1, 128>}, {transform_indices = @transform_7, window_bounds = array<i64: 16, 128>}]} {
    %c0 = arith.constant 0 : index
    %c0_0 = arith.constant 0 : index
    %0 = vector.load %arg2[%c0, %c0_0] : memref<16x128xf32, #tpu.memory_space<vmem>>, vector<16x128xf32>
    %1 = arith.truncf %0 : vector<16x128xf32> to vector<16x128xbf16>
    %c0_1 = arith.constant 0 : index
    %c0_2 = arith.constant 0 : index
    %2 = vector.load %arg3[%c0_1, %c0_2] : memref<128x512xbf16, #tpu.memory_space<vmem>>, vector<128x512xbf16>
    %cst = arith.constant dense<0.000000e+00> : vector<16x512xf32>
    %3 = tpu.matmul %1, %2, %cst {dimension_numbers = #tpu.dot_dimension_numbers<[1], [0], [0], [1], [0, 0, 1, 1], [], []>} : vector<16x128xbf16>, vector<128x512xbf16>, vector<16x512xf32> -> vector<16x512xf32>
    %c0_3 = arith.constant 0 : index
    %c0_4 = arith.constant 0 : index
    %4 = vector.load %arg4[%c0_3, %c0_4] : memref<1x512xf32, #tpu.memory_space<vmem>>, vector<1x512xf32>
    %5 = vector.broadcast %4 : vector<1x512xf32> to vector<16x512xf32>
    %6 = arith.addf %3, %5 : vector<16x512xf32>
    %7 = arith.mulf %6, %6 : vector<16x512xf32>
    %8 = arith.mulf %6, %7 : vector<16x512xf32>
    %cst_5 = arith.constant 4.471500e-02 : f32
    %9 = vector.broadcast %cst_5 : f32 to vector<16x512xf32>
    %10 = arith.mulf %9, %8 : vector<16x512xf32>
    %11 = arith.addf %6, %10 : vector<16x512xf32>
    %cst_6 = arith.constant 0.797884583 : f32
    %12 = vector.broadcast %cst_6 : f32 to vector<16x512xf32>
    %13 = arith.mulf %12, %11 : vector<16x512xf32>
    %14 = math.tanh %13 : vector<16x512xf32>
    %cst_7 = arith.constant 1.000000e+00 : f32
    %15 = vector.broadcast %cst_7 : f32 to vector<16x512xf32>
    %16 = arith.addf %15, %14 : vector<16x512xf32>
    %cst_8 = arith.constant 5.000000e-01 : f32
    %17 = vector.broadcast %cst_8 : f32 to vector<16x512xf32>
    %18 = arith.mulf %17, %16 : vector<16x512xf32>
    %19 = arith.mulf %6, %18 : vector<16x512xf32>
    %20 = arith.truncf %19 : vector<16x512xf32> to vector<16x512xbf16>
    %c0_9 = arith.constant 0 : index
    %c0_10 = arith.constant 0 : index
    %21 = vector.load %arg5[%c0_9, %c0_10] : memref<512x128xbf16, #tpu.memory_space<vmem>>, vector<512x128xbf16>
    %cst_11 = arith.constant dense<0.000000e+00> : vector<16x128xf32>
    %22 = tpu.matmul %20, %21, %cst_11 {dimension_numbers = #tpu.dot_dimension_numbers<[1], [0], [0], [1], [0, 0, 1, 1], [], []>} : vector<16x512xbf16>, vector<512x128xbf16>, vector<16x128xf32> -> vector<16x128xf32>
    %c0_i32 = arith.constant 0 : i32
    %23 = arith.cmpi eq, %arg1, %c0_i32 : i32
    %24 = arith.extui %23 : i1 to i32
    %c0_i32_12 = arith.constant 0 : i32
    %25 = arith.cmpi ne, %24, %c0_i32_12 : i32
    scf.if %25 {
      %c0_17 = arith.constant 0 : index
      %c0_18 = arith.constant 0 : index
      %32 = vector.load %arg10[%c0_17, %c0_18] : memref<16x128xf32, #tpu.memory_space<vmem>>, vector<16x128xf32>
      tpu.vector_store %arg10[%c0_17, %c0_18], %22 {strides = array<i32>} : memref<16x128xf32, #tpu.memory_space<vmem>>, vector<16x128xf32>,
    } else {
    }
    %c0_i32_13 = arith.constant 0 : i32
    %26 = arith.cmpi sgt, %arg1, %c0_i32_13 : i32
    %27 = arith.extui %26 : i1 to i32
    %c0_i32_14 = arith.constant 0 : i32
    %28 = arith.cmpi ne, %27, %c0_i32_14 : i32
    scf.if %28 {
      %c0_17 = arith.constant 0 : index
      %c0_18 = arith.constant 0 : index
      %32 = vector.load %arg10[%c0_17, %c0_18] : memref<16x128xf32, #tpu.memory_space<vmem>>, vector<16x128xf32>
      %33 = arith.addf %32, %22 : vector<16x128xf32>
      %c0_19 = arith.constant 0 : index
      %c0_20 = arith.constant 0 : index
      %34 = vector.load %arg10[%c0_19, %c0_20] : memref<16x128xf32, #tpu.memory_space<vmem>>, vector<16x128xf32>
      tpu.vector_store %arg10[%c0_19, %c0_20], %33 {strides = array<i32>} : memref<16x128xf32, #tpu.memory_space<vmem>>, vector<16x128xf32>,
    } else {
    }
    %c0_i32_15 = arith.constant 0 : i32
    %29 = arith.cmpi eq, %arg1, %c0_i32_15 : i32
    %30 = arith.extui %29 : i1 to i32
    %c0_i32_16 = arith.constant 0 : i32
    %31 = arith.cmpi ne, %30, %c0_i32_16 : i32
    scf.if %31 {
      %c0_17 = arith.constant 0 : index
      %c0_18 = arith.constant 0 : index
      %32 = vector.load %arg10[%c0_17, %c0_18] : memref<16x128xf32, #tpu.memory_space<vmem>>, vector<16x128xf32>
      %c0_19 = arith.constant 0 : index
      %c0_20 = arith.constant 0 : index
      %33 = vector.load %arg6[%c0_19, %c0_20] : memref<1x128xf32, #tpu.memory_space<vmem>>, vector<1x128xf32>
      %34 = vector.broadcast %33 : vector<1x128xf32> to vector<16x128xf32>
      %35 = arith.addf %32, %34 : vector<16x128xf32>
      %36 = arith.addf %35, %0 : vector<16x128xf32>
      %cst_21 = arith.constant dense<0.000000e+00> : vector<16xf32>
      %37 = vector.multi_reduction <add>, %36, %cst_21 [1] : vector<16x128xf32> to vector<16xf32>
      %38 = vector.shape_cast %37 : vector<16xf32> to vector<16x1xf32>
      %cst_22 = arith.constant 1.280000e+02 : f32
      %39 = vector.broadcast %cst_22 : f32 to vector<16x1xf32>
      %40 = arith.divf %38, %39 : vector<16x1xf32>
      %41 = vector.broadcast %40 : vector<16x1xf32> to vector<16x128xf32>
      %42 = arith.subf %36, %41 : vector<16x128xf32>
      %43 = arith.mulf %42, %42 : vector<16x128xf32>
      %cst_23 = arith.constant dense<0.000000e+00> : vector<16xf32>
      %44 = vector.multi_reduction <add>, %43, %cst_23 [1] : vector<16x128xf32> to vector<16xf32>
      %45 = vector.shape_cast %44 : vector<16xf32> to vector<16x1xf32>
      %cst_24 = arith.constant 1.280000e+02 : f32
      %46 = vector.broadcast %cst_24 : f32 to vector<16x1xf32>
      %47 = arith.divf %45, %46 : vector<16x1xf32>
      %cst_25 = arith.constant 9.99999996E-13 : f32
      %48 = vector.broadcast %cst_25 : f32 to vector<16x1xf32>
      %49 = arith.addf %47, %48 : vector<16x1xf32>
      %50 = math.rsqrt %49 : vector<16x1xf32>
      %51 = vector.broadcast %50 : vector<16x1xf32> to vector<16x128xf32>
      %52 = arith.mulf %42, %51 : vector<16x128xf32>
      %c0_26 = arith.constant 0 : index
      %c0_27 = arith.constant 0 : index
      %53 = vector.load %arg7[%c0_26, %c0_27] : memref<1x128xf32, #tpu.memory_space<vmem>>, vector<1x128xf32>
      %54 = vector.broadcast %53 : vector<1x128xf32> to vector<16x128xf32>
      %55 = arith.mulf %52, %54 : vector<16x128xf32>
      %c0_28 = arith.constant 0 : index
      %c0_29 = arith.constant 0 : index
      %56 = vector.load %arg8[%c0_28, %c0_29] : memref<1x128xf32, #tpu.memory_space<vmem>>, vector<1x128xf32>
      %57 = vector.broadcast %56 : vector<1x128xf32> to vector<16x128xf32>
      %58 = arith.addf %55, %57 : vector<16x128xf32>
      %c0_30 = arith.constant 0 : index
      %c0_31 = arith.constant 0 : index
      %59 = vector.load %arg9[%c0_30, %c0_31] : memref<16x128xf32, #tpu.memory_space<vmem>>, vector<16x128xf32>
      tpu.vector_store %arg9[%c0_30, %c0_31], %58 {strides = array<i32>} : memref<16x128xf32, #tpu.memory_space<vmem>>, vector<16x128xf32>,
    } else {
    }
    return
  }
  func.func @transform_0(%arg0: i32, %arg1: i32) -> (i32, i32) {
    %c0_i32 = arith.constant 0 : i32
    %c0_i32_0 = arith.constant 0 : i32
    return %arg0, %c0_i32 : i32, i32
  }
  func.func @transform_1(%arg0: i32, %arg1: i32) -> (i32, i32) {
    %c0_i32 = arith.constant 0 : i32
    %c0_i32_0 = arith.constant 0 : i32
    return %c0_i32, %arg1 : i32, i32
  }
  func.func @transform_2(%arg0: i32, %arg1: i32) -> (i32, i32) {
    %c0_i32 = arith.constant 0 : i32
    %c0_i32_0 = arith.constant 0 : i32
    return %c0_i32, %arg1 : i32, i32
  }
  func.func @transform_3(%arg0: i32, %arg1: i32) -> (i32, i32) {
    %c0_i32 = arith.constant 0 : i32
    %c0_i32_0 = arith.constant 0 : i32
    return %arg1, %c0_i32 : i32, i32
  }
  func.func @transform_4(%arg0: i32, %arg1: i32) -> (i32, i32) {
    %c0_i32 = arith.constant 0 : i32
    %c0_i32_0 = arith.constant 0 : i32
    %c0_i32_1 = arith.constant 0 : i32
    return %c0_i32, %c0_i32_0 : i32, i32
  }
  func.func @transform_5(%arg0: i32, %arg1: i32) -> (i32, i32) {
    %c0_i32 = arith.constant 0 : i32
    %c0_i32_0 = arith.constant 0 : i32
    %c0_i32_1 = arith.constant 0 : i32
    return %c0_i32, %c0_i32_0 : i32, i32
  }
  func.func @transform_6(%arg0: i32, %arg1: i32) -> (i32, i32) {
    %c0_i32 = arith.constant 0 : i32
    %c0_i32_0 = arith.constant 0 : i32
    %c0_i32_1 = arith.constant 0 : i32
    return %c0_i32, %c0_i32_0 : i32, i32
  }
  func.func @transform_7(%arg0: i32, %arg1: i32) -> (i32, i32) {
    %c0_i32 = arith.constant 0 : i32
    %c0_i32_0 = arith.constant 0 : i32
    return %arg0, %c0_i32 : i32, i32
  }
}

</mosaic_0001>

<llo_original>
// kernel: tpu_custom_call.1
$region0: #{tpu_custom_call.1}
  #allocation0 [shape = 'u32[]', space=smem, size = 0x4, offset = 0x4, fixed_abs, tag = 'smem constant byte address 0x4 - core index']
  #allocation1 [shape = 'u32[72,128]{1,0:T(1,128)}', space=vmem, size = 0x9000, scoped, tag = 'internal scratch']
  #allocation2 [shape = 'f32[16,128]{1,0:T(8,128)}', space=vmem, size = 0x2000, scoped, tag = 'scratch operand']
  %s0 = inlined_call_operand.hbm [shape: f32[16,128], index: 0, kind: input, shape index: {}]
  %s1 = inlined_call_operand.hbm [shape: bf16[128,512], index: 1, kind: input, shape index: {}]
  %s2 = inlined_call_operand.hbm [shape: f32[1,512], index: 2, kind: input, shape index: {}]
  %s3 = inlined_call_operand.hbm [shape: bf16[512,128], index: 3, kind: input, shape index: {}]
  %s4 = inlined_call_operand.vmem [shape: f32[1,128], index: 4, kind: input, shape index: {}]
  %s5 = inlined_call_operand.vmem [shape: f32[1,128], index: 5, kind: input, shape index: {}]
  %s6 = inlined_call_operand.vmem [shape: f32[1,128], index: 6, kind: input, shape index: {}]
  %s7 = inlined_call_operand.hbm [shape: f32[16,128], index: 7, kind: output, shape index: {}]
  %s8 = sld [smem:[#allocation0]]
  $region66: #{tpu_custom_call.1} parent=0
    _
  %s10 = ssub.s32 1, %s8
  %s11 = scalar_select 0, %s10, %s8
  $region1: #{tpu_custom_call.1} parent=0
    #allocation3 [shape = 'u8[8192]{0}', space=vmem, size = 0x2000, scoped, tag = 'input window, operand 0, single buffered']
    #allocation4 [shape = 's32[1]{0}', space=sflag, size = 0x4, scoped, tag = 'scoped memory for tpu_custom_call.1']
    #allocation5 [shape = 's32[1]{0}', space=sflag, size = 0x4, scoped, tag = 'scoped memory for tpu_custom_call.1']
    #allocation6 [shape = 'u8[131072]{0}', space=vmem, size = 0x20000, scoped, tag = 'input window, operand 1, single buffered']
    #allocation7 [shape = 's32[1]{0}', space=sflag, size = 0x4, scoped, tag = 'scoped memory for tpu_custom_call.1']
    #allocation8 [shape = 'u8[2048]{0}', space=vmem, size = 0x800, scoped, tag = 'input window, operand 2, single buffered']
    #allocation9 [shape = 'u8[131072]{0}', space=vmem, size = 0x20000, scoped, tag = 'input window, operand 3, single buffered']
    #allocation10 [shape = 's32[1]{0}', space=sflag, size = 0x4, scoped, tag = 'scoped memory for tpu_custom_call.1']
    #allocation11 [shape = 'u8[8192]{0}', space=vmem, size = 0x2000, scoped, tag = 'output window, operand 0, single buffered']
    %12 = vsyncpa [#allocation4], 0
    %13 = vsyncpa [#allocation7], 0
    %14 = vsyncpa [#allocation10], 0
    %15 = vsyncpa [#allocation5], 0
    // Predicated region
    $region2: #{tpu_custom_call.1} parent=1 // pred_check
      _
    $region3: #{tpu_custom_call.1} parent=1 // pred_check_branch
      %17 = sbr.rel (0) target = $region5
    $region4: #{tpu_custom_call.1} parent=1 // pred_region
      %19 = vsyncadd [#allocation4], 0
      %s20 = sshll.u32 %s0, 4
      %s21 = int_to_ptr.hbm [resolvable:$true] %s20
      %s22 = sshll.u32 [#allocation3], 4
      %s23 = int_to_ptr.vmem [resolvable:$true] %s22
      %28 = dma.hbm_to_vmem [thread:$0]  %s21, 256, %s23, [#allocation4], 128, 128, 8
    $region5: #{tpu_custom_call.1} parent=1 // pred_fallthru
      _
    // Predicated region
    $region6: #{tpu_custom_call.1} parent=1 // pred_check
      _
    $region7: #{tpu_custom_call.1} parent=1 // pred_check_branch
      %30 = sbr.rel (0) target = $region9
    $region8: #{tpu_custom_call.1} parent=1 // pred_region
      %32 = vsyncadd [#allocation7], 0
      %s33 = sshll.u32 %s1, 4
      %s34 = int_to_ptr.hbm [resolvable:$true] %s33
      %s35 = sshll.u32 [#allocation6], 4
      %s36 = int_to_ptr.vmem [resolvable:$true] %s35
      %41 = dma.hbm_to_vmem [thread:$0]  %s34, 4096, %s36, [#allocation7], 256, 256, 16
    $region9: #{tpu_custom_call.1} parent=1 // pred_fallthru
      _
    // Predicated region
    $region10: #{tpu_custom_call.1} parent=1 // pred_check
      _
    $region11: #{tpu_custom_call.1} parent=1 // pred_check_branch
      %43 = sbr.rel (0) target = $region13
    $region12: #{tpu_custom_call.1} parent=1 // pred_region
      %45 = vsyncadd [#allocation7], 0
      %s47 = sshll.u32 %s2, 4
      %s48 = int_to_ptr.hbm [resolvable:$true] %s47
      %s49 = sshll.u32 [#allocation8], 4
      %s50 = int_to_ptr.vmem [resolvable:$true] %s49
      %52 = dma.hbm_to_vmem [thread:$0]  %s48, 64, %s50, [#allocation7]
    $region13: #{tpu_custom_call.1} parent=1 // pred_fallthru
      _
    // Predicated region
    $region14: #{tpu_custom_call.1} parent=1 // pred_check
      _
    $region15: #{tpu_custom_call.1} parent=1 // pred_check_branch
      %54 = sbr.rel (0) target = $region17
    $region16: #{tpu_custom_call.1} parent=1 // pred_region
      %56 = vsyncadd [#allocation10], 0
      %s57 = sshll.u32 %s3, 4
      %s58 = int_to_ptr.hbm [resolvable:$true] %s57
      %s59 = sshll.u32 [#allocation9], 4
      %s60 = int_to_ptr.vmem [resolvable:$true] %s59
      %65 = dma.hbm_to_vmem [thread:$0]  %s58, 4096, %s60, [#allocation10], 64, 64, 4
    $region17: #{tpu_custom_call.1} parent=1 // pred_fallthru
      _
    // Predicated region
    $region18: #{tpu_custom_call.1} parent=1 // pred_check
      _
    $region19: #{tpu_custom_call.1} parent=1 // pred_check_branch
      %67 = sbr.rel (0) target = $region21
    $region20: #{tpu_custom_call.1} parent=1 // pred_region
      _
    $region21: #{tpu_custom_call.1} parent=1 // pred_fallthru
      _
    // Predicated region
    $region22: #{tpu_custom_call.1} parent=1 // pred_check
      _
    $region23: #{tpu_custom_call.1} parent=1 // pred_check_branch
      %69 = sbr.rel (0) target = $region25
    $region24: #{tpu_custom_call.1} parent=1 // pred_region
      _
    $region25: #{tpu_custom_call.1} parent=1 // pred_fallthru
      _
    // Predicated region
    $region26: #{tpu_custom_call.1} parent=1 // pred_check
      _
    $region27: #{tpu_custom_call.1} parent=1 // pred_check_branch
      %71 = sbr.rel (0) target = $region29
    $region28: #{tpu_custom_call.1} parent=1 // pred_region
      _
    $region29: #{tpu_custom_call.1} parent=1 // pred_fallthru
      _
    // Predicated region
    $region30: #{tpu_custom_call.1} parent=1 // pred_check
      _
    $region31: #{tpu_custom_call.1} parent=1 // pred_check_branch
      %73 = sbr.rel (0) target = $region33
    $region32: #{tpu_custom_call.1} parent=1 // pred_region
      %75 = dma.done [#allocation4], 256
    $region33: #{tpu_custom_call.1} parent=1 // pred_fallthru
      _
    // Predicated region
    $region34: #{tpu_custom_call.1} parent=1 // pred_check
      _
    $region35: #{tpu_custom_call.1} parent=1 // pred_check_branch
      %77 = sbr.rel (0) target = $region37
    $region36: #{tpu_custom_call.1} parent=1 // pred_region
      %79 = dma.done [#allocation7], 4096
    $region37: #{tpu_custom_call.1} parent=1 // pred_fallthru
      _
    // Predicated region
    $region38: #{tpu_custom_call.1} parent=1 // pred_check
      _
    $region39: #{tpu_custom_call.1} parent=1 // pred_check_branch
      %81 = sbr.rel (0) target = $region41
    $region40: #{tpu_custom_call.1} parent=1 // pred_region
      %83 = dma.done [#allocation7], 64
    $region41: #{tpu_custom_call.1} parent=1 // pred_fallthru
      _
    // Predicated region
    $region42: #{tpu_custom_call.1} parent=1 // pred_check
      _
    $region43: #{tpu_custom_call.1} parent=1 // pred_check_branch
      %85 = sbr.rel (0) target = $region45
    $region44: #{tpu_custom_call.1} parent=1 // pred_region
      %87 = dma.done [#allocation10], 4096
    $region45: #{tpu_custom_call.1} parent=1 // pred_fallthru
      _
    %v88 = vld [vmem:[#allocation3] sm:$0xff]
    %v89 = vld [vmem:[#allocation3 + $0x8] sm:$0xff]
    %v90 = vpack.c.bf16 %v89, %v88
    %v91 = vld [vmem:[#allocation6] sm:$0xff]
    %v92 = vld [vmem:[#allocation6 + $0x8] sm:$0xff]
    %v93 = vld [vmem:[#allocation6 + $0x10] sm:$0xff]
    %v94 = vld [vmem:[#allocation6 + $0x18] sm:$0xff]
    %v95 = vld [vmem:[#allocation6 + $0x20] sm:$0xff]
    %v96 = vld [vmem:[#allocation6 + $0x28] sm:$0xff]
    %v97 = vld [vmem:[#allocation6 + $0x30] sm:$0xff]
    %v98 = vld [vmem:[#allocation6 + $0x38] sm:$0xff]
    %v99 = vld [vmem:[#allocation6 + $0x40] sm:$0xff]
    %v100 = vld [vmem:[#allocation6 + $0x48] sm:$0xff]
    %v101 = vld [vmem:[#allocation6 + $0x50] sm:$0xff]
    %v102 = vld [vmem:[#allocation6 + $0x58] sm:$0xff]
    %v103 = vld [vmem:[#allocation6 + $0x60] sm:$0xff]
    %v104 = vld [vmem:[#allocation6 + $0x68] sm:$0xff]
    %v105 = vld [vmem:[#allocation6 + $0x70] sm:$0xff]
    %v106 = vld [vmem:[#allocation6 + $0x78] sm:$0xff]
    %v107 = vld [vmem:[#allocation6 + $0x80] sm:$0xff]
    %v108 = vld [vmem:[#allocation6 + $0x88] sm:$0xff]
    %v109 = vld [vmem:[#allocation6 + $0x90] sm:$0xff]
    %v110 = vld [vmem:[#allocation6 + $0x98] sm:$0xff]
    %v111 = vld [vmem:[#allocation6 + $0xa0] sm:$0xff]
    %v112 = vld [vmem:[#allocation6 + $0xa8] sm:$0xff]
    %v113 = vld [vmem:[#allocation6 + $0xb0] sm:$0xff]
    %v114 = vld [vmem:[#allocation6 + $0xb8] sm:$0xff]
    %v115 = vld [vmem:[#allocation6 + $0xc0] sm:$0xff]
    %v116 = vld [vmem:[#allocation6 + $0xc8] sm:$0xff]
    %v117 = vld [vmem:[#allocation6 + $0xd0] sm:$0xff]
    %v118 = vld [vmem:[#allocation6 + $0xd8] sm:$0xff]
    %v119 = vld [vmem:[#allocation6 + $0xe0] sm:$0xff]
    %v120 = vld [vmem:[#allocation6 + $0xe8] sm:$0xff]
    %v121 = vld [vmem:[#allocation6 + $0xf0] sm:$0xff]
    %v122 = vld [vmem:[#allocation6 + $0xf8] sm:$0xff]
    %v123 = vld [vmem:[#allocation8] sm:$0xf]
    %v125 = vperm.slane %v123, 0
    %v126 = vperm.slane %v123, 1
    %v127 = vperm.slane %v123, 2
    %v128 = vperm.slane %v123, 3
    %v165 = vunpack.c.l.b16 %v91
    %v166 = vunpack.c.h.b16 %v91
    %v167 = vunpack.c.l.b16 %v92
    %v168 = vunpack.c.h.b16 %v92
    %v169 = vunpack.c.l.b16 %v93
    %v170 = vunpack.c.h.b16 %v93
    %v171 = vunpack.c.l.b16 %v94
    %v172 = vunpack.c.h.b16 %v94
    %v173 = vunpack.c.l.b16 %v95
    %v174 = vunpack.c.h.b16 %v95
    %v175 = vunpack.c.l.b16 %v96
    %v176 = vunpack.c.h.b16 %v96
    %v177 = vunpack.c.l.b16 %v97
    %v178 = vunpack.c.h.b16 %v97
    %v179 = vunpack.c.l.b16 %v98
    %v180 = vunpack.c.h.b16 %v98
    %v181 = vunpack.c.l.b16 %v99
    %v182 = vunpack.c.h.b16 %v99
    %v183 = vunpack.c.l.b16 %v100
    %v184 = vunpack.c.h.b16 %v100
    %v185 = vunpack.c.l.b16 %v101
    %v186 = vunpack.c.h.b16 %v101
    %v187 = vunpack.c.l.b16 %v102
    %v188 = vunpack.c.h.b16 %v102
    %v189 = vunpack.c.l.b16 %v103
    %v190 = vunpack.c.h.b16 %v103
    %v191 = vunpack.c.l.b16 %v104
    %v192 = vunpack.c.h.b16 %v104
    %v193 = vunpack.c.l.b16 %v105
    %v194 = vunpack.c.h.b16 %v105
    %v195 = vunpack.c.l.b16 %v106
    %v196 = vunpack.c.h.b16 %v106
    %v197 = vunpack.c.l.b16 %v107
    %v198 = vunpack.c.h.b16 %v107
    %v199 = vunpack.c.l.b16 %v108
    %v200 = vunpack.c.h.b16 %v108
    %v201 = vunpack.c.l.b16 %v109
    %v202 = vunpack.c.h.b16 %v109
    %v203 = vunpack.c.l.b16 %v110
    %v204 = vunpack.c.h.b16 %v110
    %v205 = vunpack.c.l.b16 %v111
    %v206 = vunpack.c.h.b16 %v111
    %v207 = vunpack.c.l.b16 %v112
    %v208 = vunpack.c.h.b16 %v112
    %v209 = vunpack.c.l.b16 %v113
    %v210 = vunpack.c.h.b16 %v113
    %v211 = vunpack.c.l.b16 %v114
    %v212 = vunpack.c.h.b16 %v114
    %v213 = vunpack.c.l.b16 %v115
    %v214 = vunpack.c.h.b16 %v115
    %v215 = vunpack.c.l.b16 %v116
    %v216 = vunpack.c.h.b16 %v116
    %v217 = vunpack.c.l.b16 %v117
    %v218 = vunpack.c.h.b16 %v117
    %v219 = vunpack.c.l.b16 %v118
    %v220 = vunpack.c.h.b16 %v118
    %v221 = vunpack.c.l.b16 %v119
    %v222 = vunpack.c.h.b16 %v119
    %v223 = vunpack.c.l.b16 %v120
    %v224 = vunpack.c.h.b16 %v120
    %v225 = vunpack.c.l.b16 %v121
    %v226 = vunpack.c.h.b16 %v121
    %v227 = vunpack.c.l.b16 %v122
    %v228 = vunpack.c.h.b16 %v122
    %v229 = vpack.c.b16 %v169, %v165
    %v230 = vpack.c.b16 %v170, %v166
    %v231 = vpack.c.b16 %v171, %v167
    %v232 = vpack.c.b16 %v172, %v168
    %v233 = vpack.c.b16 %v177, %v173
    %v234 = vpack.c.b16 %v178, %v174
    %v235 = vpack.c.b16 %v179, %v175
    %v236 = vpack.c.b16 %v180, %v176
    %v237 = vpack.c.b16 %v185, %v181
    %v238 = vpack.c.b16 %v186, %v182
    %v239 = vpack.c.b16 %v187, %v183
    %v240 = vpack.c.b16 %v188, %v184
    %v241 = vpack.c.b16 %v193, %v189
    %v242 = vpack.c.b16 %v194, %v190
    %v243 = vpack.c.b16 %v195, %v191
    %v244 = vpack.c.b16 %v196, %v192
    %v245 = vpack.c.b16 %v201, %v197
    %v246 = vpack.c.b16 %v202, %v198
    %v247 = vpack.c.b16 %v203, %v199
    %v248 = vpack.c.b16 %v204, %v200
    %v249 = vpack.c.b16 %v209, %v205
    %v250 = vpack.c.b16 %v210, %v206
    %v251 = vpack.c.b16 %v211, %v207
    %v252 = vpack.c.b16 %v212, %v208
    %v253 = vpack.c.b16 %v217, %v213
    %v254 = vpack.c.b16 %v218, %v214
    %v255 = vpack.c.b16 %v219, %v215
    %v256 = vpack.c.b16 %v220, %v216
    %v257 = vpack.c.b16 %v225, %v221
    %v258 = vpack.c.b16 %v226, %v222
    %v259 = vpack.c.b16 %v227, %v223
    %v260 = vpack.c.b16 %v228, %v224
    %293 = vmatpush.bf16.msra.mxu0 %v257
    %294 = vmatpush.bf16.msra.mxu0 %v253
    %295 = vmatpush.bf16.msra.mxu0 %v249
    %296 = vmatpush.bf16.msra.mxu0 %v245
    %297 = vmatpush.bf16.msra.mxu0 %v241
    %298 = vmatpush.bf16.msra.mxu0 %v237
    %299 = vmatpush.bf16.msra.mxu0 %v233
    %300 = vmatpush.bf16.msra.mxu0 %v229
    %301 = vmatmul.bf16.gmra.mxu0 %v90
    %v302 = vpop.f32.mrf.mxu0
    %v303 = vadd.f32 %v125, %v302
    %v304 = vpop.f32.mrf.mxu0
    %v305 = vadd.f32 %v125, %v304
    %306 = vdwg.mxu0
    %307 = vmatpush.bf16.msra.mxu0 %v258
    %308 = vmatpush.bf16.msra.mxu0 %v254
    %309 = vmatpush.bf16.msra.mxu0 %v250
    %310 = vmatpush.bf16.msra.mxu0 %v246
    %311 = vmatpush.bf16.msra.mxu0 %v242
    %312 = vmatpush.bf16.msra.mxu0 %v238
    %313 = vmatpush.bf16.msra.mxu0 %v234
    %314 = vmatpush.bf16.msra.mxu0 %v230
    %315 = vmatmul.bf16.gmra.mxu0 %v90
    %v316 = vpop.f32.mrf.mxu0
    %v317 = vadd.f32 %v126, %v316
    %v318 = vpop.f32.mrf.mxu0
    %v319 = vadd.f32 %v126, %v318
    %320 = vdwg.mxu0
    %321 = vmatpush.bf16.msra.mxu0 %v259
    %322 = vmatpush.bf16.msra.mxu0 %v255
    %323 = vmatpush.bf16.msra.mxu0 %v251
    %324 = vmatpush.bf16.msra.mxu0 %v247
    %325 = vmatpush.bf16.msra.mxu0 %v243
    %326 = vmatpush.bf16.msra.mxu0 %v239
    %327 = vmatpush.bf16.msra.mxu0 %v235
    %328 = vmatpush.bf16.msra.mxu0 %v231
    %329 = vmatmul.bf16.gmra.mxu0 %v90
    %v330 = vpop.f32.mrf.mxu0
    %v331 = vadd.f32 %v127, %v330
    %v332 = vpop.f32.mrf.mxu0
    %v333 = vadd.f32 %v127, %v332
    %334 = vdwg.mxu0
    %335 = vmatpush.bf16.msra.mxu0 %v260
    %336 = vmatpush.bf16.msra.mxu0 %v256
    %337 = vmatpush.bf16.msra.mxu0 %v252
    %338 = vmatpush.bf16.msra.mxu0 %v248
    %339 = vmatpush.bf16.msra.mxu0 %v244
    %340 = vmatpush.bf16.msra.mxu0 %v240
    %341 = vmatpush.bf16.msra.mxu0 %v236
    %342 = vmatpush.bf16.msra.mxu0 %v232
    %343 = vmatmul.bf16.gmra.mxu0 %v90
    %v344 = vpop.f32.mrf.mxu0
    %v345 = vadd.f32 %v128, %v344
    %v346 = vpop.f32.mrf.mxu0
    %v347 = vadd.f32 %v128, %v346
    %348 = vdwg.mxu0
    %v349 = vmul.f32 %v303, %v303
    %v350 = vmul.f32 %v317, %v317
    %v351 = vmul.f32 %v331, %v331
    %v352 = vmul.f32 %v345, %v345
    %v353 = vmul.f32 %v305, %v305
    %v354 = vmul.f32 %v319, %v319
    %v355 = vmul.f32 %v333, %v333
    %v356 = vmul.f32 %v347, %v347
    %v357 = vmul.f32 %v303, %v349
    %v358 = vmul.f32 %v317, %v350
    %v359 = vmul.f32 %v331, %v351
    %v360 = vmul.f32 %v345, %v352
    %v361 = vmul.f32 %v305, %v353
    %v362 = vmul.f32 %v319, %v354
    %v363 = vmul.f32 %v333, %v355
    %v364 = vmul.f32 %v347, %v356
    %v365 = vmul.f32 %v357, 0.044715
    %v366 = vmul.f32 %v358, 0.044715
    %v367 = vmul.f32 %v359, 0.044715
    %v368 = vmul.f32 %v360, 0.044715
    %v369 = vmul.f32 %v361, 0.044715
    %v370 = vmul.f32 %v362, 0.044715
    %v371 = vmul.f32 %v363, 0.044715
    %v372 = vmul.f32 %v364, 0.044715
    %v373 = vadd.f32 %v303, %v365
    %v374 = vadd.f32 %v317, %v366
    %v375 = vadd.f32 %v331, %v367
    %v376 = vadd.f32 %v345, %v368
    %v377 = vadd.f32 %v305, %v369
    %v378 = vadd.f32 %v319, %v370
    %v379 = vadd.f32 %v333, %v371
    %v380 = vadd.f32 %v347, %v372
    %v381 = vmul.f32 %v373, 0.7978846
    %v382 = vmul.f32 %v374, 0.7978846
    %v383 = vmul.f32 %v375, 0.7978846
    %v384 = vmul.f32 %v376, 0.7978846
    %v385 = vmul.f32 %v377, 0.7978846
    %v386 = vmul.f32 %v378, 0.7978846
    %v387 = vmul.f32 %v379, 0.7978846
    %v388 = vmul.f32 %v380, 0.7978846
    %v389 = vtanh.pop %v381
    %v390 = vtanh.pop %v382
    %v391 = vtanh.pop %v383
    %v392 = vtanh.pop %v384
    %v393 = vtanh.pop %v385
    %v394 = vtanh.pop %v386
    %v395 = vtanh.pop %v387
    %v396 = vtanh.pop %v388
    %v397 = vadd.f32 %v389, 1.0
    %v398 = vadd.f32 %v390, 1.0
    %v399 = vadd.f32 %v391, 1.0
    %v400 = vadd.f32 %v392, 1.0
    %v401 = vadd.f32 %v393, 1.0
    %v402 = vadd.f32 %v394, 1.0
    %v403 = vadd.f32 %v395, 1.0
    %v404 = vadd.f32 %v396, 1.0
    %v405 = vmul.f32 %v397, 0.5
    %v406 = vmul.f32 %v398, 0.5
    %v407 = vmul.f32 %v399, 0.5
    %v408 = vmul.f32 %v400, 0.5
    %v409 = vmul.f32 %v401, 0.5
    %v410 = vmul.f32 %v402, 0.5
    %v411 = vmul.f32 %v403, 0.5
    %v412 = vmul.f32 %v404, 0.5
    %v413 = vmul.f32 %v303, %v405
    %v414 = vmul.f32 %v317, %v406
    %v415 = vmul.f32 %v331, %v407
    %v416 = vmul.f32 %v345, %v408
    %v417 = vmul.f32 %v305, %v409
    %v418 = vmul.f32 %v319, %v410
    %v419 = vmul.f32 %v333, %v411
    %v420 = vmul.f32 %v347, %v412
    %v421 = vpack.c.bf16 %v417, %v413
    %v422 = vpack.c.bf16 %v418, %v414
    %v423 = vpack.c.bf16 %v419, %v415
    %v424 = vpack.c.bf16 %v420, %v416
    %v425 = vld [vmem:[#allocation9] sm:$0xf]
    %v426 = vld [vmem:[#allocation9 + $0x4] sm:$0xf]
    %v427 = vld [vmem:[#allocation9 + $0x8] sm:$0xf]
    %v428 = vld [vmem:[#allocation9 + $0xc] sm:$0xf]
    %v429 = vld [vmem:[#allocation9 + $0x10] sm:$0xf]
    %v430 = vld [vmem:[#allocation9 + $0x14] sm:$0xf]
    %v431 = vld [vmem:[#allocation9 + $0x18] sm:$0xf]
    %v432 = vld [vmem:[#allocation9 + $0x1c] sm:$0xf]
    %v433 = vld [vmem:[#allocation9 + $0x20] sm:$0xf]
    %v434 = vld [vmem:[#allocation9 + $0x24] sm:$0xf]
    %v435 = vld [vmem:[#allocation9 + $0x28] sm:$0xf]
    %v436 = vld [vmem:[#allocation9 + $0x2c] sm:$0xf]
    %v437 = vld [vmem:[#allocation9 + $0x30] sm:$0xf]
    %v438 = vld [vmem:[#allocation9 + $0x34] sm:$0xf]
    %v439 = vld [vmem:[#allocation9 + $0x38] sm:$0xf]
    %v440 = vld [vmem:[#allocation9 + $0x3c] sm:$0xf]
    %v441 = vld [vmem:[#allocation9 + $0x40] sm:$0xf]
    %v442 = vld [vmem:[#allocation9 + $0x44] sm:$0xf]
    %v443 = vld [vmem:[#allocation9 + $0x48] sm:$0xf]
    %v444 = vld [vmem:[#allocation9 + $0x4c] sm:$0xf]
    %v445 = vld [vmem:[#allocation9 + $0x50] sm:$0xf]
    %v446 = vld [vmem:[#allocation9 + $0x54] sm:$0xf]
    %v447 = vld [vmem:[#allocation9 + $0x58] sm:$0xf]
    %v448 = vld [vmem:[#allocation9 + $0x5c] sm:$0xf]
    %v449 = vld [vmem:[#allocation9 + $0x60] sm:$0xf]
    %v450 = vld [vmem:[#allocation9 + $0x64] sm:$0xf]
    %v451 = vld [vmem:[#allocation9 + $0x68] sm:$0xf]
    %v452 = vld [vmem:[#allocation9 + $0x6c] sm:$0xf]
    %v453 = vld [vmem:[#allocation9 + $0x70] sm:$0xf]
    %v454 = vld [vmem:[#allocation9 + $0x74] sm:$0xf]
    %v455 = vld [vmem:[#allocation9 + $0x78] sm:$0xf]
    %v456 = vld [vmem:[#allocation9 + $0x7c] sm:$0xf]
    %v457 = vld [vmem:[#allocation9 + $0x80] sm:$0xf]
    %v458 = vld [vmem:[#allocation9 + $0x84] sm:$0xf]
    %v459 = vld [vmem:[#allocation9 + $0x88] sm:$0xf]
    %v460 = vld [vmem:[#allocation9 + $0x8c] sm:$0xf]
    %v461 = vld [vmem:[#allocation9 + $0x90] sm:$0xf]
    %v462 = vld [vmem:[#allocation9 + $0x94] sm:$0xf]
    %v463 = vld [vmem:[#allocation9 + $0x98] sm:$0xf]
    %v464 = vld [vmem:[#allocation9 + $0x9c] sm:$0xf]
    %v465 = vld [vmem:[#allocation9 + $0xa0] sm:$0xf]
    %v466 = vld [vmem:[#allocation9 + $0xa4] sm:$0xf]
    %v467 = vld [vmem:[#allocation9 + $0xa8] sm:$0xf]
    %v468 = vld [vmem:[#allocation9 + $0xac] sm:$0xf]
    %v469 = vld [vmem:[#allocation9 + $0xb0] sm:$0xf]
    %v470 = vld [vmem:[#allocation9 + $0xb4] sm:$0xf]
    %v471 = vld [vmem:[#allocation9 + $0xb8] sm:$0xf]
    %v472 = vld [vmem:[#allocation9 + $0xbc] sm:$0xf]
    %v473 = vld [vmem:[#allocation9 + $0xc0] sm:$0xf]
    %v474 = vld [vmem:[#allocation9 + $0xc4] sm:$0xf]
    %v475 = vld [vmem:[#allocation9 + $0xc8] sm:$0xf]
    %v476 = vld [vmem:[#allocation9 + $0xcc] sm:$0xf]
    %v477 = vld [vmem:[#allocation9 + $0xd0] sm:$0xf]
    %v478 = vld [vmem:[#allocation9 + $0xd4] sm:$0xf]
    %v479 = vld [vmem:[#allocation9 + $0xd8] sm:$0xf]
    %v480 = vld [vmem:[#allocation9 + $0xdc] sm:$0xf]
    %v481 = vld [vmem:[#allocation9 + $0xe0] sm:$0xf]
    %v482 = vld [vmem:[#allocation9 + $0xe4] sm:$0xf]
    %v483 = vld [vmem:[#allocation9 + $0xe8] sm:$0xf]
    %v484 = vld [vmem:[#allocation9 + $0xec] sm:$0xf]
    %v485 = vld [vmem:[#allocation9 + $0xf0] sm:$0xf]
    %v486 = vld [vmem:[#allocation9 + $0xf4] sm:$0xf]
    %v487 = vld [vmem:[#allocation9 + $0xf8] sm:$0xf]
    %v488 = vld [vmem:[#allocation9 + $0xfc] sm:$0xf]
    %v553 = vunpack.c.l.b16 %v425
    %v554 = vunpack.c.l.b16 %v426
    %v555 = vunpack.c.l.b16 %v427
    %v556 = vunpack.c.l.b16 %v428
    %v557 = vunpack.c.l.b16 %v429
    %v558 = vunpack.c.l.b16 %v430
    %v559 = vunpack.c.l.b16 %v431
    %v560 = vunpack.c.l.b16 %v432
    %v561 = vunpack.c.l.b16 %v433
    %v562 = vunpack.c.l.b16 %v434
    %v563 = vunpack.c.l.b16 %v435
    %v564 = vunpack.c.l.b16 %v436
    %v565 = vunpack.c.l.b16 %v437
    %v566 = vunpack.c.l.b16 %v438
    %v567 = vunpack.c.l.b16 %v439
    %v568 = vunpack.c.l.b16 %v440
    %v569 = vunpack.c.l.b16 %v441
    %v570 = vunpack.c.l.b16 %v442
    %v571 = vunpack.c.l.b16 %v443
    %v572 = vunpack.c.l.b16 %v444
    %v573 = vunpack.c.l.b16 %v445
    %v574 = vunpack.c.l.b16 %v446
    %v575 = vunpack.c.l.b16 %v447
    %v576 = vunpack.c.l.b16 %v448
    %v577 = vunpack.c.l.b16 %v449
    %v578 = vunpack.c.l.b16 %v450
    %v579 = vunpack.c.l.b16 %v451
    %v580 = vunpack.c.l.b16 %v452
    %v581 = vunpack.c.l.b16 %v453
    %v582 = vunpack.c.l.b16 %v454
    %v583 = vunpack.c.l.b16 %v455
    %v584 = vunpack.c.l.b16 %v456
    %v585 = vunpack.c.l.b16 %v457
    %v586 = vunpack.c.l.b16 %v458
    %v587 = vunpack.c.l.b16 %v459
    %v588 = vunpack.c.l.b16 %v460
    %v589 = vunpack.c.l.b16 %v461
    %v590 = vunpack.c.l.b16 %v462
    %v591 = vunpack.c.l.b16 %v463
    %v592 = vunpack.c.l.b16 %v464
    %v593 = vunpack.c.l.b16 %v465
    %v594 = vunpack.c.l.b16 %v466
    %v595 = vunpack.c.l.b16 %v467
    %v596 = vunpack.c.l.b16 %v468
    %v597 = vunpack.c.l.b16 %v469
    %v598 = vunpack.c.l.b16 %v470
    %v599 = vunpack.c.l.b16 %v471
    %v600 = vunpack.c.l.b16 %v472
    %v601 = vunpack.c.l.b16 %v473
    %v602 = vunpack.c.l.b16 %v474
    %v603 = vunpack.c.l.b16 %v475
    %v604 = vunpack.c.l.b16 %v476
    %v605 = vunpack.c.l.b16 %v477
    %v606 = vunpack.c.l.b16 %v478
    %v607 = vunpack.c.l.b16 %v479
    %v608 = vunpack.c.l.b16 %v480
    %v609 = vunpack.c.l.b16 %v481
    %v610 = vunpack.c.l.b16 %v482
    %v611 = vunpack.c.l.b16 %v483
    %v612 = vunpack.c.l.b16 %v484
    %v613 = vunpack.c.l.b16 %v485
    %v614 = vunpack.c.l.b16 %v486
    %v615 = vunpack.c.l.b16 %v487
    %v616 = vunpack.c.l.b16 %v488
    %v617 = vpack.c.b16 %v554, %v553
    %v618 = vpack.c.b16 %v556, %v555
    %v619 = vpack.c.b16 %v558, %v557
    %v620 = vpack.c.b16 %v560, %v559
    %v621 = vpack.c.b16 %v562, %v561
    %v622 = vpack.c.b16 %v564, %v563
    %v623 = vpack.c.b16 %v566, %v565
    %v624 = vpack.c.b16 %v568, %v567
    %v625 = vpack.c.b16 %v570, %v569
    %v626 = vpack.c.b16 %v572, %v571
    %v627 = vpack.c.b16 %v574, %v573
    %v628 = vpack.c.b16 %v576, %v575
    %v629 = vpack.c.b16 %v578, %v577
    %v630 = vpack.c.b16 %v580, %v579
    %v631 = vpack.c.b16 %v582, %v581
    %v632 = vpack.c.b16 %v584, %v583
    %v633 = vpack.c.b16 %v586, %v585
    %v634 = vpack.c.b16 %v588, %v587
    %v635 = vpack.c.b16 %v590, %v589
    %v636 = vpack.c.b16 %v592, %v591
    %v637 = vpack.c.b16 %v594, %v593
    %v638 = vpack.c.b16 %v596, %v595
    %v639 = vpack.c.b16 %v598, %v597
    %v640 = vpack.c.b16 %v600, %v599
    %v641 = vpack.c.b16 %v602, %v601
    %v642 = vpack.c.b16 %v604, %v603
    %v643 = vpack.c.b16 %v606, %v605
    %v644 = vpack.c.b16 %v608, %v607
    %v645 = vpack.c.b16 %v610, %v609
    %v646 = vpack.c.b16 %v612, %v611
    %v647 = vpack.c.b16 %v614, %v613
    %v648 = vpack.c.b16 %v616, %v615
    %681 = vmatpush.bf16.msra.mxu0 %v624
    %682 = vmatpush.bf16.msra.mxu0 %v623
    %683 = vmatpush.bf16.msra.mxu0 %v622
    %684 = vmatpush.bf16.msra.mxu0 %v621
    %685 = vmatpush.bf16.msra.mxu0 %v620
    %686 = vmatpush.bf16.msra.mxu0 %v619
    %687 = vmatpush.bf16.msra.mxu0 %v618
    %688 = vmatpush.bf16.msra.mxu0 %v617
    %689 = vmatmul.bf16.gmra.mxu0 %v421
    %v690 = vpop.f32.mrf.mxu0
    %v691 = vadd.f32 0.0, %v690
    %v692 = vpop.f32.mrf.mxu0
    %v693 = vadd.f32 0.0, %v692
    %694 = vdwg.mxu0
    %695 = vmatpush.bf16.msra.mxu0 %v632
    %696 = vmatpush.bf16.msra.mxu0 %v631
    %697 = vmatpush.bf16.msra.mxu0 %v630
    %698 = vmatpush.bf16.msra.mxu0 %v629
    %699 = vmatpush.bf16.msra.mxu0 %v628
    %700 = vmatpush.bf16.msra.mxu0 %v627
    %701 = vmatpush.bf16.msra.mxu0 %v626
    %702 = vmatpush.bf16.msra.mxu0 %v625
    %703 = vmatmul.bf16.gmra.mxu0 %v422
    %v704 = vpop.f32.mrf.mxu0
    %v705 = vadd.f32 %v691, %v704
    %v706 = vpop.f32.mrf.mxu0
    %v707 = vadd.f32 %v693, %v706
    %708 = vdwg.mxu0
    %709 = vmatpush.bf16.msra.mxu0 %v640
    %710 = vmatpush.bf16.msra.mxu0 %v639
    %711 = vmatpush.bf16.msra.mxu0 %v638
    %712 = vmatpush.bf16.msra.mxu0 %v637
    %713 = vmatpush.bf16.msra.mxu0 %v636
    %714 = vmatpush.bf16.msra.mxu0 %v635
    %715 = vmatpush.bf16.msra.mxu0 %v634
    %716 = vmatpush.bf16.msra.mxu0 %v633
    %717 = vmatmul.bf16.gmra.mxu0 %v423
    %v718 = vpop.f32.mrf.mxu0
    %v719 = vadd.f32 %v705, %v718
    %v720 = vpop.f32.mrf.mxu0
    %v721 = vadd.f32 %v707, %v720
    %722 = vdwg.mxu0
    %723 = vmatpush.bf16.msra.mxu0 %v648
    %724 = vmatpush.bf16.msra.mxu0 %v647
    %725 = vmatpush.bf16.msra.mxu0 %v646
    %726 = vmatpush.bf16.msra.mxu0 %v645
    %727 = vmatpush.bf16.msra.mxu0 %v644
    %728 = vmatpush.bf16.msra.mxu0 %v643
    %729 = vmatpush.bf16.msra.mxu0 %v642
    %730 = vmatpush.bf16.msra.mxu0 %v641
    %731 = vmatmul.bf16.gmra.mxu0 %v424
    %v732 = vpop.f32.mrf.mxu0
    %v733 = vadd.f32 %v719, %v732
    %v734 = vpop.f32.mrf.mxu0
    %v735 = vadd.f32 %v721, %v734
    %736 = vdwg.mxu0
    %p737 = scmp.eq.s32.totalorder 0, 0
    // Predicated region
    $region46: #{tpu_custom_call.1} parent=1 // pred_check
      %p738 = pneg %p737
    $region47: #{tpu_custom_call.1} parent=1 // pred_check_branch
      %740 = sbr.rel (%p738) target = $region49
    $region48: #{tpu_custom_call.1} parent=1 // pred_region
      %741 = vst [vmem:[#allocation2] sm:$0xff] %v733
      %742 = vst [vmem:[#allocation2 + $0x8] sm:$0xff] %v735
    $region49: #{tpu_custom_call.1} parent=1 // pred_fallthru
      _
    %p743 = scmp.gt.s32.totalorder 0, 0
    // Predicated region
    $region50: #{tpu_custom_call.1} parent=1 // pred_check
      %p744 = pneg %p743
    $region51: #{tpu_custom_call.1} parent=1 // pred_check_branch
      %746 = sbr.rel (%p744) target = $region53
    $region52: #{tpu_custom_call.1} parent=1 // pred_region
      %v747 = vld [vmem:[#allocation2] sm:$0xff]
      %v748 = vld [vmem:[#allocation2 + $0x8] sm:$0xff]
      %v749 = vadd.f32 %v747, %v733
      %v750 = vadd.f32 %v748, %v735
      %751 = vst [vmem:[#allocation2] sm:$0xff] %v749
      %752 = vst [vmem:[#allocation2 + $0x8] sm:$0xff] %v750
    $region53: #{tpu_custom_call.1} parent=1 // pred_fallthru
      _
    // Predicated region
    $region54: #{tpu_custom_call.1} parent=1 // pred_check
      %p753 = pneg %p737
    $region55: #{tpu_custom_call.1} parent=1 // pred_check_branch
      %755 = sbr.rel (%p753) target = $region57
    $region56: #{tpu_custom_call.1} parent=1 // pred_region
      %v756 = vld [vmem:[#allocation2] sm:$0xff]
      %v757 = vld [vmem:[#allocation2 + $0x8] sm:$0xff]
      %v758 = vld [vmem:[%s4] sm:$0x1]
      %v760 = vperm.slane %v758, 0
      %v762 = vadd.f32 %v756, %v760
      %v763 = vadd.f32 %v757, %v760
      %v764 = vadd.f32 %v762, %v88
      %v765 = vadd.f32 %v763, %v89
      %766 = vadd.xlane.f32.xlu0 %v764
      %v767 = vpop.xlane.xlu0 %766
      %768 = vadd.xlane.f32.xlu0 %v765
      %v769 = vpop.xlane.xlu0 %768
      %v770 = vrcp.pop 128.0
      %v771 = vmul.f32 128.0, %v770
      %v772 = vsub.f32 1.0, %v771
      %v773 = vmul.f32 %v770, %v772
      %v774 = vadd.f32 %v770, %v773
      %vm775 = vweird.f32 %v770
      %v776 = vsel %vm775, %v770, %v774
      %v777 = vmul.f32 %v767, %v776
      %v778 = vmul.f32 %v769, %v776
      %v779 = vsub.f32 %v764, %v777
      %v780 = vsub.f32 %v765, %v778
      %v781 = vmul.f32 %v779, %v779
      %v782 = vmul.f32 %v780, %v780
      %783 = vadd.xlane.f32.xlu0 %v781
      %v784 = vpop.xlane.xlu0 %783
      %785 = vadd.xlane.f32.xlu0 %v782
      %v786 = vpop.xlane.xlu0 %785
      %v787 = vmul.f32 %v784, %v776
      %v788 = vmul.f32 %v786, %v776
      %v789 = vadd.f32 %v787, 1e-12
      %v790 = vadd.f32 %v788, 1e-12
      %v791 = vrsqrt.pop %v789
      %v792 = vmul.f32 %v791, %v789
      %v793 = vmul.f32 %v792, %v791
      %v794 = vmul.f32 0.5, %v793
      %v795 = vsub.f32 1.5, %v794
      %v796 = vmul.f32 %v791, %v795
      %vm797 = vweird.f32 %v789
      %vm798 = vweird.f32 %v791
      %vm799 = vmor %vm797, %vm798
      %v800 = vsel %vm799, %v791, %v796
      %v801 = vrsqrt.pop %v790
      %v802 = vmul.f32 %v801, %v790
      %v803 = vmul.f32 %v802, %v801
      %v804 = vmul.f32 0.5, %v803
      %v805 = vsub.f32 1.5, %v804
      %v806 = vmul.f32 %v801, %v805
      %vm807 = vweird.f32 %v790
      %vm808 = vweird.f32 %v801
      %vm809 = vmor %vm807, %vm808
      %v810 = vsel %vm809, %v801, %v806
      %v811 = vmul.f32 %v779, %v800
      %v812 = vmul.f32 %v780, %v810
      %v813 = vld [vmem:[%s5] sm:$0x1]
      %v815 = vperm.slane %v813, 0
      %v817 = vmul.f32 %v811, %v815
      %v818 = vmul.f32 %v812, %v815
      %v819 = vld [vmem:[%s6] sm:$0x1]
      %v821 = vperm.slane %v819, 0
      %v823 = vadd.f32 %v817, %v821
      %v824 = vadd.f32 %v818, %v821
      %825 = vst [vmem:[#allocation11] sm:$0xff] %v823
      %826 = vst [vmem:[#allocation11 + $0x8] sm:$0xff] %v824
    $region57: #{tpu_custom_call.1} parent=1 // pred_fallthru
      _
    // Predicated region
    $region58: #{tpu_custom_call.1} parent=1 // pred_check
      _
    $region59: #{tpu_custom_call.1} parent=1 // pred_check_branch
      %828 = sbr.rel (0) target = $region61
    $region60: #{tpu_custom_call.1} parent=1 // pred_region
      %830 = vsyncadd [#allocation5], 0
      %s831 = sshll.u32 [#allocation11], 4
      %s832 = int_to_ptr.vmem [resolvable:$true] %s831
      %s833 = sshll.u32 %s7, 4
      %s834 = int_to_ptr.hbm [resolvable:$true] %s833
      %839 = dma.vmem_to_hbm [thread:$0]  %s832, 256, %s834, [#allocation5], 128, 128, 8
    $region61: #{tpu_custom_call.1} parent=1 // pred_fallthru
      _
    // Predicated region
    $region62: #{tpu_custom_call.1} parent=1 // pred_check
      _
    $region63: #{tpu_custom_call.1} parent=1 // pred_check_branch
      %841 = sbr.rel (0) target = $region65
    $region64: #{tpu_custom_call.1} parent=1 // pred_region
      %843 = dma.done [#allocation5], 256
    $region65: #{tpu_custom_call.1} parent=1 // pred_fallthru
      _
    %844 = vsyncpa [#allocation4], 1
    %845 = vsyncpa [#allocation7], 1
    %846 = vsyncpa [#allocation10], 1
    %847 = vsyncpa [#allocation5], 1

</llo_original>
